<compile_context>
chip_gen: v7x
topology: tpu7x:2x2x1
jax: 0.10.0
libtpu: 0.0.40
codegen_flags: <defaults>
</compile_context>

<pallas_src>
import functools

import jax
import jax.numpy as jnp
from jax.experimental import pallas as pl
from jax.experimental.pallas import tpu as pltpu


@functools.lru_cache(maxsize=1)
def _detect_tpu():
    """Best-effort (is_v7x_like, per-core VMEM bytes).  Conservative on failure."""
    kind = ""
    try:
        kind = jax.devices()[0].device_kind.lower()
    except Exception:
        pass
    cap = None
    try:
        info = pltpu.get_tpu_info()
        c = getattr(info, "vmem_capacity_bytes", None)
        if c:
            cap = int(c)
    except Exception:
        pass
    # v7x: 64 MiB VMEM per TensorCore, 2 TensorCores/chip.  v5e/v6e: 128 MiB, 1 TC.
    is_v7 = ("7" in kind) or (cap is not None and cap <= 80 * 2**20)
    if cap is None:
        cap = (64 * 2**20) if (is_v7 or not kind) else (128 * 2**20)
    per_core = min(cap, 64 * 2**20) if is_v7 else cap
    return is_v7, per_core


def _joint_mse_kernel(*refs, rows, row_tile, nblk_per_core, use_weight, w_resident):
    if use_weight:
        pred_ref, gt_ref, w2_ref, out_ref, acc_ref = refs
    else:
        pred_ref, gt_ref, out_ref, acc_ref = refs

    c = pl.program_id(0)   # core-split axis
    i = pl.program_id(1)   # row-block axis within this core ("arbitrary")

    @pl.when(i == 0)
    def _():
        acc_ref[...] = jnp.zeros_like(acc_ref)

    # Cast (possibly bf16) heatmap tiles to f32 in-register; accumulate in f32.
    d = pred_ref[...].astype(jnp.float32) - gt_ref[...].astype(jnp.float32)
    row_ss = jnp.sum(d * d, axis=-1, keepdims=True)            # (row_tile, 1)

    row_start = (c * nblk_per_core + i) * row_tile

    if use_weight:
        # (w*(p-g))^2 == w^2*(p-g)^2 : w^2 is precomputed in the wrapper and kept
        # resident in VMEM (single DMA), sliced per block.
        if w_resident:
            start = pl.multiple_of(row_start, 8)
            w2 = w2_ref[pl.ds(start, row_tile), :]              # (row_tile, 1) f32
        else:
            w2 = w2_ref[...]
        contrib = row_ss * w2
    else:
        contrib = row_ss

    if rows % row_tile == 0:
        # No partial boundary block exists -> no mask ops compiled at all.
        acc_ref[...] += contrib
    else:
        is_full = row_start + row_tile <= rows

        @pl.when(is_full)
        def _():                                               # interior fast path
            acc_ref[...] += contrib

        @pl.when(jnp.logical_not(is_full))
        def _():                                               # single boundary block
            rid = row_start + jax.lax.broadcasted_iota(jnp.int32, (row_tile, 1), 0)
            # Select-based masking: garbage (possibly NaN/Inf) rows past the real
            # array never propagate.
            acc_ref[...] += jnp.where(rid < rows, contrib, 0.0)

    # Only the last step per core does the cross-row reduce and the single scalar
    # store into this core's output block.
    @pl.when(i == nblk_per_core - 1)
    def _():
        out_ref[...] = jnp.sum(acc_ref[...]).reshape(1, 1, 1)


def joint_mse_loss(output, target, target_weight=None,
                   use_target_weight=True, divided_num_joints=True,
                   row_tile=None, force_cores=None):
    B, J, H, W = output.shape
    rows = B * J
    hw = H * W

    # Free metadata reshapes; heatmap dtype left untouched in HBM.
    pred = output.reshape(rows, hw)
    gt = target.reshape(rows, hw)

    itemsize = max(pred.dtype.itemsize, gt.dtype.itemsize)
    # Row granularity keeping native sublane packing: f32 -> 8, bf16 -> 16.
    sub = 8 * max(1, 4 // itemsize)
    rows_up = pl.cdiv(rows, sub) * sub

    is_v7, per_core_vmem = _detect_tpu()
    # ~40% of per-core VMEM for the streamed working set; scoped limit ~75%
    # (=> ~96 MiB on 128 MiB v5e/v6e parts, ~48 MiB on 64 MiB v7x cores).
    vmem_budget = max(8 * 2**20, min(64 * 2**20, int(per_core_vmem * 0.4)))
    vmem_cap_limit = max(32 * 2**20, min(100 * 2**20, int(per_core_vmem * 0.75)))
    max_cores = 2 if is_v7 else 1
    if force_cores is not None:
        max_cores = int(force_cores)

    use_weight = bool(use_target_weight)
    # Keep w^2 resident only while its (lane-padded, double-buffered) footprint is
    # a small fraction of the budget; otherwise fall back to per-block w^2 DMA.
    w_resident = use_weight and (2 * 512 * rows_up) <= vmem_budget // 4

    # Per-row VMEM cost: 2 inputs x 2 pipeline buffers + lane-padded (row,1)
    # accumulator (512 B/row) + lane-padded weight buffers (<=1024 B/row).
    bytes_per_row = 4 * hw * itemsize + 512 + (1024 if use_weight else 0)
    fixed_bytes = (2 * 512 * rows_up) if w_resident else 0
    avail = max(vmem_budget - fixed_bytes, bytes_per_row * sub)
    tile_cap = max(sub, ((avail // bytes_per_row) // sub) * sub)   # no 1024 cap

    if row_tile is None:
        row_tile = tile_cap
    row_tile = max(sub, (int(row_tile) // sub) * sub)
    row_tile = min(row_tile, rows_up)

    # Core split only with an exactly even block count (no dead/duplicate blocks).
    nblk_total = pl.cdiv(rows_up, row_tile)
    ncores = 1
    if max_cores >= 2 and nblk_total >= 2:
        if nblk_total % 2 == 0:
            ncores = 2
        else:
            alt = max(sub, pl.cdiv(pl.cdiv(rows_up, nblk_total + 1), sub) * sub)
            if pl.cdiv(rows_up, alt) % 2 == 0:
                row_tile = alt
                nblk_total = pl.cdiv(rows_up, alt)
                ncores = 2
    nblk_per_core = nblk_total // ncores
    rows_pad = ncores * nblk_per_core * row_tile       # == nblk_total * row_tile >= rows

    def hm_map(c, i):
        return (c * nblk_per_core + i, 0)

    in_arrays = [pred, gt]
    in_specs = [pl.BlockSpec((row_tile, hw), hm_map),   # pred (lane dim full-extent)
                pl.BlockSpec((row_tile, hw), hm_map)]   # gt

    if use_weight:
        w = target_weight.reshape(rows, -1)[:, :1].astype(jnp.float32)
        w2 = w * w                                      # fold to w^2 once (tiny array)
        if rows_pad > rows:
            w2 = jnp.pad(w2, ((0, rows_pad - rows), (0, 0)))
        in_arrays.append(w2)
        if w_resident:
            in_specs.append(pl.BlockSpec((rows_pad, 1), lambda c, i: (0, 0)))   # resident
        else:
            in_specs.append(pl.BlockSpec((row_tile, 1), hm_map))
    # use_target_weight=False: no weight input at all (no DMA, no multiply).

    if ncores == 2:
        # Explicitly request the 2-TensorCore split on v7x; plain "parallel"
        # elsewhere (e.g. when the split is forced for testing).
        core_sem = getattr(pltpu, "CORE_PARALLEL", "parallel") if is_v7 else "parallel"
    else:
        core_sem = "arbitrary"

    w2_vmem = 0
    if use_weight:
        w2_vmem = 2 * 512 * (rows_pad if w_resident else row_tile)
    est = 4 * row_tile * hw * itemsize + 512 * row_tile + w2_vmem + (2 << 20)
    vmem_limit = int(min(max(est + (4 << 20), 32 * 2**20), vmem_cap_limit))

    kernel = functools.partial(_joint_mse_kernel, rows=rows, row_tile=row_tile,
                               nblk_per_core=nblk_per_core, use_weight=use_weight,
                               w_resident=w_resident)

    bytes_accessed = (pred.size * pred.dtype.itemsize
                      + gt.size * gt.dtype.itemsize
                      + (rows_pad * 4 if use_weight else 0) + ncores * 4)

    partials = pl.pallas_call(
        kernel,
        out_shape=jax.ShapeDtypeStruct((ncores, 1, 1), jnp.float32),
        grid_spec=pltpu.PrefetchScalarGridSpec(
            num_scalar_prefetch=0,
            grid=(ncores, nblk_per_core),
            in_specs=in_specs,
            out_specs=pl.BlockSpec((1, 1, 1), lambda c, i: (c, 0, 0)),
            scratch_shapes=[pltpu.VMEM((row_tile, 1), jnp.float32)],
        ),
        compiler_params=pltpu.CompilerParams(
            dimension_semantics=(core_sem, "arbitrary"),
            vmem_limit_bytes=vmem_limit),
        cost_estimate=pl.CostEstimate(
            flops=int(3 * rows * hw + rows),
            transcendentals=0,
            bytes_accessed=int(bytes_accessed)),
    )(*in_arrays)

    total = jnp.sum(partials)
    # Each per-joint MSELoss(reduction='mean') divides by B*HW; the J terms are
    # summed, then optionally divided by J.  (The spec has NO 0.5 factor.)
    loss = total / jnp.float32(B * hw)
    if divided_num_joints:
        loss = loss / jnp.float32(J)
    return loss


def _reference_joint_mse(output, target, target_weight,
                         use_target_weight=True, divided_num_joints=True):
    """Pure-JAX mirror of the PyTorch forward for correctness checking."""
    B, J, H, W = output.shape
    pred = output.reshape(B, J, -1).astype(jnp.float32)
    gt = target.reshape(B, J, -1).astype(jnp.float32)
    loss = jnp.float32(0.0)
    for j in range(J):
        p = pred[:, j]
        g = gt[:, j]
        if use_target_weight:
            wj = target_weight[:, j].astype(jnp.float32)   # (B, 1)
            p = p * wj
            g = g * wj
        loss = loss + jnp.mean((p - g) ** 2)
    if divided_num_joints:
        loss = loss / J
    return loss


if __name__ == "__main__":
    # 1) Primary small case (f32, single block, weight resident, fast path).
    k1, k2, k3 = jax.random.split(jax.random.PRNGKey(0), 3)
    B, J, H, W = 2, 4, 16, 16
    output = jax.random.normal(k1, (B, J, H, W), dtype=jnp.float32)
    target = jax.random.normal(k2, (B, J, H, W), dtype=jnp.float32)
    tw = jax.random.uniform(k3, (B, J, 1), dtype=jnp.float32)

    loss = jax.block_until_ready(joint_mse_loss(output, target, tw, True, True))
    ref = _reference_joint_mse(output, target, tw, True, True)
    assert jnp.allclose(loss, ref, rtol=1e-5, atol=1e-6), (loss, ref)

    # use_target_weight=False: weight path (input + multiply) removed entirely.
    loss_nw = jax.block_until_ready(joint_mse_loss(output, target, tw, False, True))
    ref_nw = _reference_joint_mse(output, target, tw, False, True)
    assert jnp.allclose(loss_nw, ref_nw, rtol=1e-5, atol=1e-6), (loss_nw, ref_nw)

    # 2) Ragged shapes: rows not a multiple of the tile, HW < 128 lanes.
    k4, k5, k6 = jax.random.split(jax.random.PRNGKey(1), 3)
    o2 = jax.random.normal(k4, (3, 5, 12, 9), dtype=jnp.float32)
    t2 = jax.random.normal(k5, (3, 5, 12, 9), dtype=jnp.float32)
    w2 = jax.random.uniform(k6, (3, 5, 1), dtype=jnp.float32)
    l2 = jax.block_until_ready(joint_mse_loss(o2, t2, w2, True, True))
    r2 = _reference_joint_mse(o2, t2, w2, True, True)
    assert jnp.allclose(l2, r2, rtol=1e-5, atol=1e-6), (l2, r2)

    # 3) bf16 heatmaps streamed without upcast, multi-block grid, partial tail.
    k7, k8, k9 = jax.random.split(jax.random.PRNGKey(2), 3)
    o3 = jax.random.normal(k7, (8, 21, 16, 16), dtype=jnp.bfloat16)
    t3 = jax.random.normal(k8, (8, 21, 16, 16), dtype=jnp.bfloat16)
    w3 = jax.random.uniform(k9, (8, 21, 1), dtype=jnp.float32)
    l3 = jax.block_until_ready(joint_mse_loss(o3, t3, w3, True, True, row_tile=16))
    r3 = _reference_joint_mse(o3, t3, w3, True, True)
    assert jnp.allclose(l3, r3, rtol=1e-4, atol=1e-6), (l3, r3)

    # 4) Forced 2-core split with an even block count (exercises the core axis and
    #    the resident-weight dynamic slicing across both cores).
    ka, kb, kc = jax.random.split(jax.random.PRNGKey(3), 3)
    o4 = jax.random.normal(ka, (8, 16, 16, 16), dtype=jnp.float32)
    t4 = jax.random.normal(kb, (8, 16, 16, 16), dtype=jnp.float32)
    w4 = jax.random.uniform(kc, (8, 16, 1), dtype=jnp.float32)
    l4 = jax.block_until_ready(joint_mse_loss(o4, t4, w4, True, True,
                                              row_tile=16, force_cores=2))
    r4 = _reference_joint_mse(o4, t4, w4, True, True)
    assert jnp.allclose(l4, r4, rtol=1e-5, atol=1e-6), (l4, r4)

    # 5) Forced 2-core split that must re-tile (odd block count -> even) and hit
    #    the boundary-masked tail block on the second core.
    kd, ke, kf = jax.random.split(jax.random.PRNGKey(4), 3)
    o5 = jax.random.normal(kd, (7, 8, 8, 8), dtype=jnp.float32)
    t5 = jax.random.normal(ke, (7, 8, 8, 8), dtype=jnp.float32)
    w5 = jax.random.uniform(kf, (7, 8, 1), dtype=jnp.float32)
    l5 = jax.block_until_ready(joint_mse_loss(o5, t5, w5, True, False,
                                              row_tile=24, force_cores=2))
    r5 = _reference_joint_mse(o5, t5, w5, True, False)
    assert jnp.allclose(l5, r5, rtol=1e-5, atol=1e-6), (l5, r5)

    print("KERNEL_OK")
</pallas_src>

<mosaic_0001>
module attributes {stable_mosaic.version = 11 : i64} {
  func.func @_joint_mse_kernel(%arg0: i32, %arg1: i32, %arg2: memref<8x256xf32, #tpu.memory_space<vmem>>, %arg3: memref<8x256xf32, #tpu.memory_space<vmem>>, %arg4: memref<8x1xf32, #tpu.memory_space<vmem>>, %arg5: memref<1x1x1xf32, #tpu.memory_space<vmem>>, %arg6: memref<8x1xf32, #tpu.memory_space<vmem>>) attributes {dimension_semantics = [#tpu.dimension_semantics<arbitrary>, #tpu.dimension_semantics<arbitrary>], iteration_bounds = array<i64: 1, 1>, scalar_prefetch = 0 : i64, scratch_operands = 1 : i64, tpu.core_type = #tpu.core_type<tc>, window_params = [{transform_indices = @transform_0, window_bounds = array<i64: 8, 256>}, {transform_indices = @transform_1, window_bounds = array<i64: 8, 256>}, {pipeline_mode = #tpu.pipeline_mode<synchronous>, transform_indices = @transform_2, window_bounds = array<i64: 8, 1>}, {transform_indices = @transform_3, window_bounds = array<i64: 1, 1, 1>}]} {
    %c0_i32 = arith.constant 0 : i32
    %0 = arith.cmpi eq, %arg1, %c0_i32 : i32
    %1 = arith.extui %0 : i1 to i32
    %c0_i32_0 = arith.constant 0 : i32
    %2 = arith.cmpi ne, %1, %c0_i32_0 : i32
    scf.if %2 {
      %cst_11 = arith.constant 0.000000e+00 : f32
      %22 = vector.broadcast %cst_11 : f32 to vector<8x1xf32>
      %c0_12 = arith.constant 0 : index
      %c0_13 = arith.constant 0 : index
      %23 = vector.load %arg6[%c0_12, %c0_13] : memref<8x1xf32, #tpu.memory_space<vmem>>, vector<8x1xf32>
      tpu.vector_store %arg6[%c0_12, %c0_13], %22 {strides = array<i32>} : memref<8x1xf32, #tpu.memory_space<vmem>>, vector<8x1xf32>,
    } else {
    }
    %c0 = arith.constant 0 : index
    %c0_1 = arith.constant 0 : index
    %3 = vector.load %arg2[%c0, %c0_1] : memref<8x256xf32, #tpu.memory_space<vmem>>, vector<8x256xf32>
    %c0_2 = arith.constant 0 : index
    %c0_3 = arith.constant 0 : index
    %4 = vector.load %arg3[%c0_2, %c0_3] : memref<8x256xf32, #tpu.memory_space<vmem>>, vector<8x256xf32>
    %5 = arith.subf %3, %4 : vector<8x256xf32>
    %6 = arith.mulf %5, %5 : vector<8x256xf32>
    %cst = arith.constant dense<0.000000e+00> : vector<8xf32>
    %7 = vector.multi_reduction <add>, %6, %cst [1] : vector<8x256xf32> to vector<8xf32>
    %8 = vector.shape_cast %7 : vector<8xf32> to vector<8x1xf32>
    %c1_i32 = arith.constant 1 : i32
    %9 = arith.muli %arg0, %c1_i32 : i32
    %10 = arith.addi %9, %arg1 : i32
    %c8_i32 = arith.constant 8 : i32
    %11 = arith.muli %10, %c8_i32 : i32
    %12 = tpu.assume_multiple %11, 8 : i32
    %13 = arith.index_cast %12 : i32 to index
    %c0_4 = arith.constant 0 : index
    %14 = vector.load %arg4[%13, %c0_4] : memref<8x1xf32, #tpu.memory_space<vmem>>, vector<8x1xf32>
    %15 = arith.mulf %8, %14 : vector<8x1xf32>
    %c0_5 = arith.constant 0 : index
    %c0_6 = arith.constant 0 : index
    %16 = vector.load %arg6[%c0_5, %c0_6] : memref<8x1xf32, #tpu.memory_space<vmem>>, vector<8x1xf32>
    %17 = arith.addf %16, %15 : vector<8x1xf32>
    %c0_7 = arith.constant 0 : index
    %c0_8 = arith.constant 0 : index
    %18 = vector.load %arg6[%c0_7, %c0_8] : memref<8x1xf32, #tpu.memory_space<vmem>>, vector<8x1xf32>
    tpu.vector_store %arg6[%c0_7, %c0_8], %17 {strides = array<i32>} : memref<8x1xf32, #tpu.memory_space<vmem>>, vector<8x1xf32>,
    %c0_i32_9 = arith.constant 0 : i32
    %19 = arith.cmpi eq, %arg1, %c0_i32_9 : i32
    %20 = arith.extui %19 : i1 to i32
    %c0_i32_10 = arith.constant 0 : i32
    %21 = arith.cmpi ne, %20, %c0_i32_10 : i32
    scf.if %21 {
      %c0_11 = arith.constant 0 : index
      %c0_12 = arith.constant 0 : index
      %22 = vector.load %arg6[%c0_11, %c0_12] : memref<8x1xf32, #tpu.memory_space<vmem>>, vector<8x1xf32>
      %23 = vector.shape_cast %22 : vector<8x1xf32> to vector<1x8x1xf32>
      %cst_13 = arith.constant dense<0.000000e+00> : vector<1xf32>
      %24 = vector.multi_reduction <add>, %23, %cst_13 [1, 2] : vector<1x8x1xf32> to vector<1xf32>
      %25 = vector.shape_cast %24 : vector<1xf32> to vector<1x1x1xf32>
      %26 = vector.extract %25[0, 0, 0] : f32 from vector<1x1x1xf32>
      %27 = vector.broadcast %26 : f32 to vector<1x1x1xf32>
      %c0_14 = arith.constant 0 : index
      %c0_15 = arith.constant 0 : index
      %c0_16 = arith.constant 0 : index
      %28 = vector.load %arg5[%c0_14, %c0_15, %c0_16] : memref<1x1x1xf32, #tpu.memory_space<vmem>>, vector<1x1x1xf32>
      tpu.vector_store %arg5[%c0_14, %c0_15, %c0_16], %27 {strides = array<i32>} : memref<1x1x1xf32, #tpu.memory_space<vmem>>, vector<1x1x1xf32>,
    } else {
    }
    return
  }
  func.func @transform_0(%arg0: i32, %arg1: i32) -> (i32, i32) {
    %c1_i32 = arith.constant 1 : i32
    %0 = arith.muli %arg0, %c1_i32 : i32
    %1 = arith.addi %0, %arg1 : i32
    %c0_i32 = arith.constant 0 : i32
    %c0_i32_0 = arith.constant 0 : i32
    return %1, %c0_i32 : i32, i32
  }
  func.func @transform_1(%arg0: i32, %arg1: i32) -> (i32, i32) {
    %c1_i32 = arith.constant 1 : i32
    %0 = arith.muli %arg0, %c1_i32 : i32
    %1 = arith.addi %0, %arg1 : i32
    %c0_i32 = arith.constant 0 : i32
    %c0_i32_0 = arith.constant 0 : i32
    return %1, %c0_i32 : i32, i32
  }
  func.func @transform_2(%arg0: i32, %arg1: i32) -> (i32, i32) {
    %c0_i32 = arith.constant 0 : i32
    %c0_i32_0 = arith.constant 0 : i32
    %c0_i32_1 = arith.constant 0 : i32
    return %c0_i32, %c0_i32_0 : i32, i32
  }
  func.func @transform_3(%arg0: i32, %arg1: i32) -> (i32, i32, i32) {
    %c0_i32 = arith.constant 0 : i32
    %c0_i32_0 = arith.constant 0 : i32
    %c0_i32_1 = arith.constant 0 : i32
    return %arg0, %c0_i32, %c0_i32_0 : i32, i32, i32
  }
}

</mosaic_0001>

<llo_original>
// kernel: tpu_custom_call.1
$region0: #{tpu_custom_call.1}
  #allocation0 [shape = 'u32[]', space=smem, size = 0x4, offset = 0x4, fixed_abs, tag = 'smem constant byte address 0x4 - core index']
  #allocation1 [shape = 'u32[144,128]{1,0:T(1,128)}', space=vmem, size = 0x12000, scoped, tag = 'internal scratch']
  #allocation2 [shape = 'f32[8,1]{1,0:T(8,128)}', space=vmem, size = 0x1000, scoped, tag = 'scratch operand']
  %s0 = inlined_call_operand.hbm [shape: f32[8,256], index: 0, kind: input, shape index: {}]
  %s1 = inlined_call_operand.hbm [shape: f32[8,256], index: 1, kind: input, shape index: {}]
  %s2 = inlined_call_operand.vmem [shape: f32[8,1], index: 2, kind: input, shape index: {}]
  %s3 = inlined_call_operand.hbm [shape: f32[1,1,1], index: 3, kind: output, shape index: {}]
  %s4 = sld [smem:[#allocation0]]
  $region38: #{tpu_custom_call.1} parent=0
    _
  %s6 = ssub.s32 1, %s4
  %s7 = scalar_select 0, %s6, %s4
  $region1: #{tpu_custom_call.1} parent=0
    #allocation3 [shape = 'u8[8192]{0}', space=vmem, size = 0x2000, scoped, tag = 'input window, operand 0, single buffered']
    #allocation4 [shape = 's32[1]{0}', space=sflag, size = 0x4, scoped, tag = 'scoped memory for tpu_custom_call.1']
    #allocation5 [shape = 's32[1]{0}', space=sflag, size = 0x4, scoped, tag = 'scoped memory for tpu_custom_call.1']
    #allocation6 [shape = 'u8[8192]{0}', space=vmem, size = 0x2000, scoped, tag = 'input window, operand 1, single buffered']
    #allocation7 [shape = 's32[1]{0}', space=sflag, size = 0x4, scoped, tag = 'scoped memory for tpu_custom_call.1']
    #allocation8 [shape = 'u8[512]{0}', space=vmem, size = 0x400, scoped, tag = 'output window, operand 0, single buffered']
    %8 = vsyncpa [#allocation4], 0
    %9 = vsyncpa [#allocation7], 0
    %10 = vsyncpa [#allocation5], 0
    // Predicated region
    $region2: #{tpu_custom_call.1} parent=1 // pred_check
      _
    $region3: #{tpu_custom_call.1} parent=1 // pred_check_branch
      %12 = sbr.rel (0) target = $region5
    $region4: #{tpu_custom_call.1} parent=1 // pred_region
      %s13 = sadd.s32 0, 0
      %s15 = ssub.s32 256, 256
      %16 = vsyncadd [#allocation4], %s15
      %s17 = smul.addr %s13, 2
      %s18 = smul.addr %s17, 128
      %s19 = scalar_lea.hbm %s0, %s18
      %s21 = sshll.u32 [#allocation3], 4
      %s22 = int_to_ptr.vmem [resolvable:$true] %s21
      %24 = dma.hbm_to_vmem [thread:$0]  %s19, 256, %s22, [#allocation4]
    $region5: #{tpu_custom_call.1} parent=1 // pred_fallthru
      _
    // Predicated region
    $region6: #{tpu_custom_call.1} parent=1 // pred_check
      _
    $region7: #{tpu_custom_call.1} parent=1 // pred_check_branch
      %26 = sbr.rel (0) target = $region9
    $region8: #{tpu_custom_call.1} parent=1 // pred_region
      %s27 = sadd.s32 0, 0
      %s29 = ssub.s32 256, 256
      %30 = vsyncadd [#allocation7], %s29
      %s31 = smul.addr %s27, 2
      %s32 = smul.addr %s31, 128
      %s33 = scalar_lea.hbm %s1, %s32
      %s35 = sshll.u32 [#allocation6], 4
      %s36 = int_to_ptr.vmem [resolvable:$true] %s35
      %38 = dma.hbm_to_vmem [thread:$0]  %s33, 256, %s36, [#allocation7]
    $region9: #{tpu_custom_call.1} parent=1 // pred_fallthru
      _
    // Predicated region
    $region10: #{tpu_custom_call.1} parent=1 // pred_check
      _
    $region11: #{tpu_custom_call.1} parent=1 // pred_check_branch
      %40 = sbr.rel (0) target = $region13
    $region12: #{tpu_custom_call.1} parent=1 // pred_region
      _
    $region13: #{tpu_custom_call.1} parent=1 // pred_fallthru
      _
    // Predicated region
    $region14: #{tpu_custom_call.1} parent=1 // pred_check
      _
    $region15: #{tpu_custom_call.1} parent=1 // pred_check_branch
      %42 = sbr.rel (0) target = $region17
    $region16: #{tpu_custom_call.1} parent=1 // pred_region
      %43 = dma.done [#allocation4], 256
    $region17: #{tpu_custom_call.1} parent=1 // pred_fallthru
      _
    // Predicated region
    $region18: #{tpu_custom_call.1} parent=1 // pred_check
      _
    $region19: #{tpu_custom_call.1} parent=1 // pred_check_branch
      %45 = sbr.rel (0) target = $region21
    $region20: #{tpu_custom_call.1} parent=1 // pred_region
      %46 = dma.done [#allocation7], 256
    $region21: #{tpu_custom_call.1} parent=1 // pred_fallthru
      _
    %s47 = sadd.s32 0, 0
    %s48 = sadd.s32 0, 0
    %p49 = scmp.eq.s32.totalorder 0, 0
    // Predicated region
    $region22: #{tpu_custom_call.1} parent=1 // pred_check
      %p50 = pneg %p49
    $region23: #{tpu_custom_call.1} parent=1 // pred_check_branch
      %52 = sbr.rel (%p50) target = $region25
    $region24: #{tpu_custom_call.1} parent=1 // pred_region
      %vm53 = vcmask 7168
      %54 = vst.msk [vmem:[#allocation2] sm:$0xff] %vm53, 0.0
    $region25: #{tpu_custom_call.1} parent=1 // pred_fallthru
      _
    %v55 = vld [vmem:[#allocation3] sm:$0xff]
    %v56 = vld [vmem:[#allocation3 + $0x8] sm:$0xff]
    %v57 = vld [vmem:[#allocation6] sm:$0xff]
    %v58 = vld [vmem:[#allocation6 + $0x8] sm:$0xff]
    %v59 = vsub.f32 %v55, %v57
    %v60 = vsub.f32 %v56, %v58
    %v61 = vmul.f32 %v59, %v59
    %v62 = vmul.f32 %v60, %v60
    %v63 = vadd.f32 %v61, %v62
    %64 = vadd.xlane.f32.xlu0 %v63
    %v65 = vpop.xlane.xlu0 %64
    %s66 = sadd.s32 0, 0
    %s67 = smul.u32 %s66, 8
    %s68 = scalar_lea.vmem %s2, %s67
    %v69 = vld [vmem:[%s68] sm:$0xff]
    %v70 = vmul.f32 %v65, %v69
    %v71 = vld [vmem:[#allocation2] sm:$0xff]
    %v72 = vadd.f32 %v71, %v70
    %vm73 = vcmask 7168
    %74 = vst.msk [vmem:[#allocation2] sm:$0xff] %vm73, %v72
    // Predicated region
    $region26: #{tpu_custom_call.1} parent=1 // pred_check
      %p75 = pneg %p49
    $region27: #{tpu_custom_call.1} parent=1 // pred_check_branch
      %77 = sbr.rel (%p75) target = $region29
    $region28: #{tpu_custom_call.1} parent=1 // pred_region
      %v78 = vld [vmem:[#allocation2] sm:$0xff]
      %v79 = vsel %vm73, %v78, 0.0
      %80 = vadd.xlane.f32.xlu0 %v79
      %v81 = vpop.xlane.xlu0 %80
      %v82 = vrot.slane %v81, 4
      %v83 = vadd.f32 %v81, %v82
      %v84 = vrot.slane %v83, 2
      %v85 = vadd.f32 %v83, %v84
      %v86 = vrot.slane %v85, 1
      %v87 = vadd.f32 %v85, %v86
      %s88 = vtos %v87
      %v89 = vstv %s88
      %vm90 = vcmask 0
      %91 = vst.msk [vmem:[#allocation8] sm:$0x1] %vm90, %v89
    $region29: #{tpu_custom_call.1} parent=1 // pred_fallthru
      _
    // Predicated region
    $region30: #{tpu_custom_call.1} parent=1 // pred_check
      _
    $region31: #{tpu_custom_call.1} parent=1 // pred_check_branch
      %93 = sbr.rel (0) target = $region33
    $region32: #{tpu_custom_call.1} parent=1 // pred_region
      %s95 = ssub.s32 16, 16
      %96 = vsyncadd [#allocation5], %s95
      %s98 = sshll.u32 [#allocation8], 4
      %s99 = int_to_ptr.vmem [resolvable:$true] %s98
      %101 = dma.vmem_to_hbm [thread:$0]  %s99, 16, %s3, [#allocation5]
    $region33: #{tpu_custom_call.1} parent=1 // pred_fallthru
      _
    // Predicated region
    $region34: #{tpu_custom_call.1} parent=1 // pred_check
      _
    $region35: #{tpu_custom_call.1} parent=1 // pred_check_branch
      %103 = sbr.rel (0) target = $region37
    $region36: #{tpu_custom_call.1} parent=1 // pred_region
      %104 = dma.done [#allocation5], 16
    $region37: #{tpu_custom_call.1} parent=1 // pred_fallthru
      _
    %105 = vsyncpa [#allocation4], 1
    %106 = vsyncpa [#allocation7], 1
    %107 = vsyncpa [#allocation5], 1

</llo_original>
